<compile_context>
chip_gen: v6e
topology: v6e:2x2x1
jax: 0.10.0
libtpu: 0.0.40
codegen_flags: <defaults>
</compile_context>

<pallas_src>
import jax
import jax.numpy as jnp
from jax import lax
from jax.experimental import pallas as pl
from jax.experimental.pallas import tpu as pltpu

_LANE = 128
_SUBLANE = 8
_PAD_LOGIT = -1e4   # sentinel: sigmoid==0, bce==0, focal weight==0 (with t=0, d=0)


def _cdiv(a, b):
    return -(-a // b)


def _round_up(a, b):
    return _cdiv(a, b) * b


def _hw_config():
    """(num_partials, max_tile_rows, vmem_limit_bytes) from the local TPU kind."""
    kind = ""
    try:
        kind = jax.devices()[0].device_kind.lower().replace(" ", "")
    except Exception:
        pass
    is_v7 = "7" in kind                                   # e.g. "tpu7x"
    two_tc = is_v7 or ("v4" in kind) or ("v5p" in kind)   # 2 TensorCores per device
    num_partials = 2 if two_tc else 1
    # v7x: 64 MiB VMEM and ~10 live (tile,128) f32 temporaries -> smaller tile.
    max_tile_rows = 2048 if is_v7 else 4096
    vmem_limit = (40 if is_v7 else 64) * 1024 * 1024
    return num_partials, max_tile_rows, vmem_limit


def _make_kernel(gamma, valid_rows, needs_mask):
    gamma = float(gamma)
    gamma_is_small_int = gamma.is_integer() and 0.0 <= gamma <= 4.0

    def kernel(x_ref, d_ref, out_ref):
        c = pl.program_id(0)
        i = pl.program_id(1)

        @pl.when(i == 0)
        def _init():
            out_ref[...] = jnp.zeros_like(out_ref)

        x = x_ref[...].astype(jnp.float32)          # logits
        d = d_ref[...]                              # distance map (f32 >= 0)

        if needs_mask:
            # Grid over-covers the (rows,128) slab: replace rows >= valid_rows
            # (garbage in OOB edge blocks) with the zero-contribution sentinel.
            tile_rows = x_ref.shape[0]
            row0 = (c * pl.num_programs(1) + i) * tile_rows
            rid = row0 + lax.broadcasted_iota(jnp.int32, x.shape, 0)
            ok = rid < valid_rows
            x = jnp.where(ok, x, _PAD_LOGIT)
            d = jnp.where(ok, d, 0.0)

        # Binary targets reconstructed from the distance map: EDT(target>0.5)
        # is exactly 0 on background and >= 1 on foreground.
        # TODO(synk): soft (non-binary) labels would need a dedicated target stream.
        t = (d > 0.0).astype(jnp.float32)

        # Stable sigmoid + BCE-with-logits sharing one EUP exp.
        e = jnp.exp(-jnp.abs(x))
        denom = 1.0 + e
        r = pl.reciprocal(denom, approx=True)       # EUP estimate ...
        r = r * (2.0 - denom * r)                   # ... + one Newton step (~f32 exact)
        p = jnp.where(x >= 0.0, r, e * r)           # sigmoid(x)

        # bce = max(x,0) - x*t + log(1 + exp(-|x|))
        ce = jnp.maximum(x, 0.0) - x * t + jnp.log(denom)

        pt = p * t                                  # dice intersection term
        omp = 1.0 - p                               # boundary term
        base = (p - pt) + (t - pt)                  # == 1 - p_t, reuses pt
        if gamma_is_small_int:
            fw = jnp.ones_like(base)
            for _ in range(int(gamma)):
                fw = fw * base
        else:
            fw = jnp.power(base, gamma)

        def rsum(v):
            # Per-vreg (8,128) partial sum: pure VPU adds, no cross-lane XLU work.
            return jnp.sum(v.reshape(-1, _SUBLANE, _LANE), axis=0)

        out_ref[0, 0] += rsum(pt)                   # sum(sigmoid * t)
        out_ref[0, 1] += rsum(p)                    # sum(sigmoid)
        out_ref[0, 2] += rsum(t)                    # sum(t)
        out_ref[0, 3] += rsum(d * (omp * omp))      # boundary numerator
        out_ref[0, 4] += rsum(fw * ce)              # focal numerator (alpha outside)

    return kernel


def _distance_transform_edt(fg, *, max_chunk_elems=32 * 1024 * 1024):
    """Exact Euclidean distance transform over ALL array dims (unit sampling):
    nonzero -> distance to nearest zero, zero -> 0.  Matches
    scipy.ndimage.distance_transform_edt applied to the full array, which is
    exactly what the PyTorch reference does (this couples samples across the
    batch/channel axes; an all-foreground target yields +inf, mirroring the
    ill-defined scipy edge case).

    Separable squared-distance passes: the first (longest) axis uses an O(L)
    two-sided nearest-zero scan (its input is binary); remaining axes use the
    exact parabola form min_j f[j] + (i-j)^2 evaluated in output chunks to
    bound memory.
    # TODO(synk): Felzenszwalb O(L) lower-envelope scan for the non-binary passes.
    """
    fg = fg.astype(bool)
    axes = [ax for ax in range(fg.ndim) if fg.shape[ax] > 1]
    if not axes:
        return jnp.where(fg, jnp.inf, 0.0).astype(jnp.float32)
    axes.sort(key=lambda ax: fg.shape[ax], reverse=True)

    # First (longest) axis: binary input -> squared distance to nearest zero.
    ax0 = axes[0]
    m = jnp.moveaxis(fg, ax0, -1)
    n = m.shape[-1]
    idx = jnp.arange(n, dtype=jnp.float32)
    last_axis = m.ndim - 1
    left = lax.cummax(jnp.where(m, -jnp.inf, idx), axis=last_axis)
    right = lax.cummin(jnp.where(m, jnp.inf, idx), axis=last_axis, reverse=True)
    d2 = jnp.minimum(idx - left, right - idx) ** 2
    d2 = jnp.moveaxis(d2, -1, ax0)

    # Remaining axes: exact 1-D pass d_new[i] = min_j d_old[j] + (i-j)^2.
    for ax in axes[1:]:
        n = d2.shape[ax]
        moved = jnp.moveaxis(d2, ax, -1)
        shp = moved.shape
        lines = moved.reshape(-1, n)
        num_lines = lines.shape[0]
        idx = jnp.arange(n, dtype=jnp.float32)
        chunk = max(1, min(n, max_chunk_elems // max(1, num_lines * n)))
        outs = []
        for start in range(0, n, chunk):
            sub = idx[start:start + chunk]
            off = (sub[:, None] - idx[None, :]) ** 2          # (chunk, n)
            outs.append(jnp.min(lines[:, None, :] + off[None, :, :], axis=-1))
        new = outs[0] if len(outs) == 1 else jnp.concatenate(outs, axis=1)
        d2 = jnp.moveaxis(new.reshape(shp), -1, ax)

    dist = jnp.sqrt(d2)
    return jnp.where(fg, dist, 0.0).astype(jnp.float32)


def combined_loss(logits, targets, *, dice_weight=1.0, boundary_weight=0.5,
                  focal_weight=1.0, focal_alpha=0.25, focal_gamma=2.0):
    assert logits.shape == targets.shape
    n_real = int(logits.size)
    assert n_real > 0

    # Distance map (plain JAX, outside the Pallas kernel).
    dist = _distance_transform_edt(targets > 0.5)

    num_partials, max_tile_rows, vmem_limit = _hw_config()

    sub = _SUBLANE if logits.dtype == jnp.float32 else 2 * _SUBLANE
    rows = _cdiv(n_real, _LANE)
    zero_copy = (n_real % _LANE == 0) and (rows >= sub)

    tile_cap = (rows // sub) * sub if zero_copy else _round_up(rows, sub)
    tile_rows = max(sub, min(max_tile_rows, tile_cap,
                             _round_up(_cdiv(rows, num_partials), sub)))
    nblocks = _cdiv(rows, tile_rows)
    steps = _cdiv(nblocks, num_partials)
    cov_rows = num_partials * steps * tile_rows

    if zero_copy:
        # Free metadata reshapes; no extra HBM pass before the kernel.
        x2d = logits.reshape(rows, _LANE)
        d2d = dist.reshape(rows, _LANE)
        valid_rows = rows
    else:
        # Rare path (numel not a multiple of 128 or fewer than `sub` rows):
        # pad once with the zero-contribution sentinel, then no in-kernel mask.
        total = cov_rows * _LANE
        x2d = jnp.pad(logits.reshape(-1), (0, total - n_real),
                      constant_values=_PAD_LOGIT).reshape(cov_rows, _LANE)
        d2d = jnp.pad(dist.reshape(-1), (0, total - n_real),
                      constant_values=0.0).reshape(cov_rows, _LANE)
        valid_rows = cov_rows
    needs_mask = valid_rows < cov_rows
    last_block = _cdiv(x2d.shape[0], tile_rows) - 1

    kernel = _make_kernel(focal_gamma, valid_rows, needs_mask)

    def in_map(c, i):
        # Clamp so a (rare) fully-out-of-bounds trailing block just re-reads
        # the last real block; its contribution is zeroed by the in-kernel mask.
        return (jnp.minimum(c * steps + i, last_block), 0)

    in_spec = pl.BlockSpec((tile_rows, _LANE), in_map)
    out_spec = pl.BlockSpec((1, 5, _SUBLANE, _LANE), lambda c, i: (c, 0, 0, 0))

    partials = pl.pallas_call(
        kernel,
        out_shape=jax.ShapeDtypeStruct((num_partials, 5, _SUBLANE, _LANE),
                                       jnp.float32),
        grid=(num_partials, steps),
        in_specs=[in_spec, in_spec],
        out_specs=out_spec,
        compiler_params=pltpu.CompilerParams(
            dimension_semantics=("parallel", "arbitrary"),
            vmem_limit_bytes=vmem_limit),
    )(x2d, d2d)

    # Tiny scalar epilogue: dice is nonlinear in the global sums, so per-core
    # raw partial sums are combined here rather than inside each core.
    sums = jnp.sum(partials, axis=(0, 2, 3))            # (5,)
    inter, p_sum, t_sum, b_sum, f_sum = (sums[k] for k in range(5))

    smooth = 1e-6
    dice = 1.0 - (2.0 * inter + smooth) / (p_sum + t_sum + smooth)
    inv_n = 1.0 / float(n_real)
    boundary = b_sum * inv_n
    focal = float(focal_alpha) * f_sum * inv_n
    return (float(dice_weight) * dice
            + float(boundary_weight) * boundary
            + float(focal_weight) * focal)


def _reference(logits, targets, *, dice_weight, boundary_weight, focal_weight,
               focal_alpha, focal_gamma):
    """Plain-JAX replica of the PyTorch forward, for a correctness check."""
    smooth = 1e-6
    logits = logits.astype(jnp.float32)
    targets = targets.astype(jnp.float32)
    p = jax.nn.sigmoid(logits)
    inter = jnp.sum(p * targets)
    dice = 1.0 - (2.0 * inter + smooth) / (jnp.sum(p) + jnp.sum(targets) + smooth)
    dist = _distance_transform_edt(targets > 0.5)
    boundary = jnp.mean(dist * (1.0 - p) ** 2)
    ce = (jnp.maximum(logits, 0.0) - logits * targets
          + jnp.log1p(jnp.exp(-jnp.abs(logits))))
    p_t = p * targets + (1.0 - p) * (1.0 - targets)
    focal = jnp.mean(focal_alpha * (1.0 - p_t) ** focal_gamma * ce)
    return (dice_weight * dice + boundary_weight * boundary
            + focal_weight * focal)


if __name__ == "__main__":
    key = jax.random.PRNGKey(0)
    k1, k2, k3, k4 = jax.random.split(key, 4)
    cfg = dict(dice_weight=1.0, boundary_weight=0.5, focal_weight=1.0,
               focal_alpha=0.25, focal_gamma=2.0)

    # Primary case (NCHW binary segmentation): exercises the padded-tail path.
    shape = (2, 1, 16, 16)
    logits = jax.random.normal(k1, shape, dtype=jnp.float32)
    targets = jax.random.bernoulli(k2, 0.4, shape).astype(jnp.float32)
    loss = jax.block_until_ready(combined_loss(logits, targets, **cfg))
    ref = _reference(logits, targets, **cfg)
    assert jnp.isfinite(loss), loss
    assert jnp.allclose(loss, ref, rtol=1e-4, atol=1e-5), (float(loss), float(ref))

    # Second case: numel is a multiple of 128 with a ragged row count, exercising
    # the zero-copy reshape + in-kernel edge-masking path (2*1*24*24 = 9 * 128).
    shape2 = (2, 1, 24, 24)
    logits2 = jax.random.normal(k3, shape2, dtype=jnp.float32)
    targets2 = jax.random.bernoulli(k4, 0.3, shape2).astype(jnp.float32)
    loss2 = jax.block_until_ready(combined_loss(logits2, targets2, **cfg))
    ref2 = _reference(logits2, targets2, **cfg)
    assert jnp.isfinite(loss2), loss2
    assert jnp.allclose(loss2, ref2, rtol=1e-4, atol=1e-5), (float(loss2), float(ref2))

    print("KERNEL_OK")
</pallas_src>

<mosaic_0001>
module attributes {stable_mosaic.version = 11 : i64} {
  func.func @kernel(%arg0: i32, %arg1: i32, %arg2: memref<8x128xf32, #tpu.memory_space<vmem>>, %arg3: memref<8x128xf32, #tpu.memory_space<vmem>>, %arg4: memref<1x5x8x128xf32, #tpu.memory_space<vmem>>) attributes {dimension_semantics = [#tpu.dimension_semantics<parallel>, #tpu.dimension_semantics<arbitrary>], iteration_bounds = array<i64: 1, 1>, scalar_prefetch = 0 : i64, scratch_operands = 0 : i64, tpu.core_type = #tpu.core_type<tc>, window_params = [{transform_indices = @transform_0, window_bounds = array<i64: 8, 128>}, {transform_indices = @transform_1, window_bounds = array<i64: 8, 128>}, {transform_indices = @transform_2, window_bounds = array<i64: 1, 5, 8, 128>}]} {
    %c0_i32 = arith.constant 0 : i32
    %0 = arith.cmpi eq, %arg1, %c0_i32 : i32
    %1 = arith.extui %0 : i1 to i32
    %c0_i32_0 = arith.constant 0 : i32
    %2 = arith.cmpi ne, %1, %c0_i32_0 : i32
    scf.if %2 {
      %cst_52 = arith.constant 0.000000e+00 : f32
      %82 = vector.broadcast %cst_52 : f32 to vector<1x5x8x128xf32>
      %c0_53 = arith.constant 0 : index
      %c0_54 = arith.constant 0 : index
      %c0_55 = arith.constant 0 : index
      %c0_56 = arith.constant 0 : index
      %83 = vector.load %arg4[%c0_53, %c0_54, %c0_55, %c0_56] : memref<1x5x8x128xf32, #tpu.memory_space<vmem>>, vector<1x5x8x128xf32>
      tpu.vector_store %arg4[%c0_53, %c0_54, %c0_55, %c0_56], %82 {strides = array<i32>} : memref<1x5x8x128xf32, #tpu.memory_space<vmem>>, vector<1x5x8x128xf32>,
    } else {
    }
    %c0 = arith.constant 0 : index
    %c0_1 = arith.constant 0 : index
    %3 = vector.load %arg2[%c0, %c0_1] : memref<8x128xf32, #tpu.memory_space<vmem>>, vector<8x128xf32>
    %c0_2 = arith.constant 0 : index
    %c0_3 = arith.constant 0 : index
    %4 = vector.load %arg3[%c0_2, %c0_3] : memref<8x128xf32, #tpu.memory_space<vmem>>, vector<8x128xf32>
    %cst = arith.constant 0.000000e+00 : f32
    %5 = vector.broadcast %cst : f32 to vector<8x128xf32>
    %6 = arith.cmpf ogt, %4, %5 : vector<8x128xf32>
    %7 = arith.extui %6 : vector<8x128xi1> to vector<8x128xi32>
    %8 = arith.sitofp %7 : vector<8x128xi32> to vector<8x128xf32>
    %9 = math.absf %3 : vector<8x128xf32>
    %cst_4 = arith.constant 0.000000e+00 : f32
    %10 = vector.broadcast %cst_4 : f32 to vector<8x128xf32>
    %11 = arith.subf %10, %9 : vector<8x128xf32>
    %12 = math.exp %11 : vector<8x128xf32>
    %cst_5 = arith.constant 1.000000e+00 : f32
    %13 = vector.broadcast %cst_5 : f32 to vector<8x128xf32>
    %14 = arith.addf %13, %12 : vector<8x128xf32>
    %15 = tpu.reciprocal %14 {approx = true} : vector<8x128xf32> -> vector<8x128xf32>
    %16 = arith.mulf %14, %15 : vector<8x128xf32>
    %cst_6 = arith.constant 2.000000e+00 : f32
    %17 = vector.broadcast %cst_6 : f32 to vector<8x128xf32>
    %18 = arith.subf %17, %16 : vector<8x128xf32>
    %19 = arith.mulf %15, %18 : vector<8x128xf32>
    %cst_7 = arith.constant 0.000000e+00 : f32
    %20 = vector.broadcast %cst_7 : f32 to vector<8x128xf32>
    %21 = arith.cmpf oge, %3, %20 : vector<8x128xf32>
    %22 = arith.mulf %12, %19 : vector<8x128xf32>
    %23 = arith.select %21, %19, %22 : vector<8x128xi1>, vector<8x128xf32>
    %cst_8 = arith.constant 0.000000e+00 : f32
    %24 = vector.broadcast %cst_8 : f32 to vector<8x128xf32>
    %25 = arith.maximumf %3, %24 : vector<8x128xf32>
    %26 = arith.mulf %3, %8 : vector<8x128xf32>
    %27 = arith.subf %25, %26 : vector<8x128xf32>
    %28 = math.log %14 : vector<8x128xf32>
    %29 = arith.addf %27, %28 : vector<8x128xf32>
    %30 = arith.mulf %23, %8 : vector<8x128xf32>
    %cst_9 = arith.constant 1.000000e+00 : f32
    %31 = vector.broadcast %cst_9 : f32 to vector<8x128xf32>
    %32 = arith.subf %31, %23 : vector<8x128xf32>
    %33 = arith.subf %23, %30 : vector<8x128xf32>
    %34 = arith.subf %8, %30 : vector<8x128xf32>
    %35 = arith.addf %33, %34 : vector<8x128xf32>
    %cst_10 = arith.constant 1.000000e+00 : f32
    %36 = vector.broadcast %cst_10 : f32 to vector<8x128xf32>
    %37 = arith.mulf %36, %35 : vector<8x128xf32>
    %38 = arith.mulf %37, %35 : vector<8x128xf32>
    %c0_11 = arith.constant 0 : index
    %c0_12 = arith.constant 0 : index
    %c0_13 = arith.constant 0 : index
    %c0_14 = arith.constant 0 : index
    %39 = vector.load %arg4[%c0_11, %c0_12, %c0_13, %c0_14] : memref<1x5x8x128xf32, #tpu.memory_space<vmem>>, vector<1x1x8x128xf32>
    %40 = vector.shape_cast %39 : vector<1x1x8x128xf32> to vector<8x128xf32>
    %41 = vector.shape_cast %30 : vector<8x128xf32> to vector<1x8x128xf32>
    %cst_15 = arith.constant dense<0.000000e+00> : vector<8x128xf32>
    %42 = vector.multi_reduction <add>, %41, %cst_15 [0] : vector<1x8x128xf32> to vector<8x128xf32>
    %43 = arith.addf %40, %42 : vector<8x128xf32>
    %c0_16 = arith.constant 0 : index
    %c0_17 = arith.constant 0 : index
    %c0_18 = arith.constant 0 : index
    %c0_19 = arith.constant 0 : index
    %44 = vector.load %arg4[%c0_16, %c0_17, %c0_18, %c0_19] : memref<1x5x8x128xf32, #tpu.memory_space<vmem>>, vector<1x1x8x128xf32>
    %45 = vector.shape_cast %44 : vector<1x1x8x128xf32> to vector<8x128xf32>
    %46 = vector.shape_cast %43 : vector<8x128xf32> to vector<1x1x8x128xf32>
    tpu.vector_store %arg4[%c0_16, %c0_17, %c0_18, %c0_19], %46 {strides = array<i32>} : memref<1x5x8x128xf32, #tpu.memory_space<vmem>>, vector<1x1x8x128xf32>,
    %c0_20 = arith.constant 0 : index
    %c1 = arith.constant 1 : index
    %c0_21 = arith.constant 0 : index
    %c0_22 = arith.constant 0 : index
    %47 = vector.load %arg4[%c0_20, %c1, %c0_21, %c0_22] : memref<1x5x8x128xf32, #tpu.memory_space<vmem>>, vector<1x1x8x128xf32>
    %48 = vector.shape_cast %47 : vector<1x1x8x128xf32> to vector<8x128xf32>
    %49 = vector.shape_cast %23 : vector<8x128xf32> to vector<1x8x128xf32>
    %cst_23 = arith.constant dense<0.000000e+00> : vector<8x128xf32>
    %50 = vector.multi_reduction <add>, %49, %cst_23 [0] : vector<1x8x128xf32> to vector<8x128xf32>
    %51 = arith.addf %48, %50 : vector<8x128xf32>
    %c0_24 = arith.constant 0 : index
    %c1_25 = arith.constant 1 : index
    %c0_26 = arith.constant 0 : index
    %c0_27 = arith.constant 0 : index
    %52 = vector.load %arg4[%c0_24, %c1_25, %c0_26, %c0_27] : memref<1x5x8x128xf32, #tpu.memory_space<vmem>>, vector<1x1x8x128xf32>
    %53 = vector.shape_cast %52 : vector<1x1x8x128xf32> to vector<8x128xf32>
    %54 = vector.shape_cast %51 : vector<8x128xf32> to vector<1x1x8x128xf32>
    tpu.vector_store %arg4[%c0_24, %c1_25, %c0_26, %c0_27], %54 {strides = array<i32>} : memref<1x5x8x128xf32, #tpu.memory_space<vmem>>, vector<1x1x8x128xf32>,
    %c0_28 = arith.constant 0 : index
    %c2 = arith.constant 2 : index
    %c0_29 = arith.constant 0 : index
    %c0_30 = arith.constant 0 : index
    %55 = vector.load %arg4[%c0_28, %c2, %c0_29, %c0_30] : memref<1x5x8x128xf32, #tpu.memory_space<vmem>>, vector<1x1x8x128xf32>
    %56 = vector.shape_cast %55 : vector<1x1x8x128xf32> to vector<8x128xf32>
    %57 = vector.shape_cast %8 : vector<8x128xf32> to vector<1x8x128xf32>
    %cst_31 = arith.constant dense<0.000000e+00> : vector<8x128xf32>
    %58 = vector.multi_reduction <add>, %57, %cst_31 [0] : vector<1x8x128xf32> to vector<8x128xf32>
    %59 = arith.addf %56, %58 : vector<8x128xf32>
    %c0_32 = arith.constant 0 : index
    %c2_33 = arith.constant 2 : index
    %c0_34 = arith.constant 0 : index
    %c0_35 = arith.constant 0 : index
    %60 = vector.load %arg4[%c0_32, %c2_33, %c0_34, %c0_35] : memref<1x5x8x128xf32, #tpu.memory_space<vmem>>, vector<1x1x8x128xf32>
    %61 = vector.shape_cast %60 : vector<1x1x8x128xf32> to vector<8x128xf32>
    %62 = vector.shape_cast %59 : vector<8x128xf32> to vector<1x1x8x128xf32>
    tpu.vector_store %arg4[%c0_32, %c2_33, %c0_34, %c0_35], %62 {strides = array<i32>} : memref<1x5x8x128xf32, #tpu.memory_space<vmem>>, vector<1x1x8x128xf32>,
    %c0_36 = arith.constant 0 : index
    %c3 = arith.constant 3 : index
    %c0_37 = arith.constant 0 : index
    %c0_38 = arith.constant 0 : index
    %63 = vector.load %arg4[%c0_36, %c3, %c0_37, %c0_38] : memref<1x5x8x128xf32, #tpu.memory_space<vmem>>, vector<1x1x8x128xf32>
    %64 = vector.shape_cast %63 : vector<1x1x8x128xf32> to vector<8x128xf32>
    %65 = arith.mulf %32, %32 : vector<8x128xf32>
    %66 = arith.mulf %4, %65 : vector<8x128xf32>
    %67 = vector.shape_cast %66 : vector<8x128xf32> to vector<1x8x128xf32>
    %cst_39 = arith.constant dense<0.000000e+00> : vector<8x128xf32>
    %68 = vector.multi_reduction <add>, %67, %cst_39 [0] : vector<1x8x128xf32> to vector<8x128xf32>
    %69 = arith.addf %64, %68 : vector<8x128xf32>
    %c0_40 = arith.constant 0 : index
    %c3_41 = arith.constant 3 : index
    %c0_42 = arith.constant 0 : index
    %c0_43 = arith.constant 0 : index
    %70 = vector.load %arg4[%c0_40, %c3_41, %c0_42, %c0_43] : memref<1x5x8x128xf32, #tpu.memory_space<vmem>>, vector<1x1x8x128xf32>
    %71 = vector.shape_cast %70 : vector<1x1x8x128xf32> to vector<8x128xf32>
    %72 = vector.shape_cast %69 : vector<8x128xf32> to vector<1x1x8x128xf32>
    tpu.vector_store %arg4[%c0_40, %c3_41, %c0_42, %c0_43], %72 {strides = array<i32>} : memref<1x5x8x128xf32, #tpu.memory_space<vmem>>, vector<1x1x8x128xf32>,
    %c0_44 = arith.constant 0 : index
    %c4 = arith.constant 4 : index
    %c0_45 = arith.constant 0 : index
    %c0_46 = arith.constant 0 : index
    %73 = vector.load %arg4[%c0_44, %c4, %c0_45, %c0_46] : memref<1x5x8x128xf32, #tpu.memory_space<vmem>>, vector<1x1x8x128xf32>
    %74 = vector.shape_cast %73 : vector<1x1x8x128xf32> to vector<8x128xf32>
    %75 = arith.mulf %38, %29 : vector<8x128xf32>
    %76 = vector.shape_cast %75 : vector<8x128xf32> to vector<1x8x128xf32>
    %cst_47 = arith.constant dense<0.000000e+00> : vector<8x128xf32>
    %77 = vector.multi_reduction <add>, %76, %cst_47 [0] : vector<1x8x128xf32> to vector<8x128xf32>
    %78 = arith.addf %74, %77 : vector<8x128xf32>
    %c0_48 = arith.constant 0 : index
    %c4_49 = arith.constant 4 : index
    %c0_50 = arith.constant 0 : index
    %c0_51 = arith.constant 0 : index
    %79 = vector.load %arg4[%c0_48, %c4_49, %c0_50, %c0_51] : memref<1x5x8x128xf32, #tpu.memory_space<vmem>>, vector<1x1x8x128xf32>
    %80 = vector.shape_cast %79 : vector<1x1x8x128xf32> to vector<8x128xf32>
    %81 = vector.shape_cast %78 : vector<8x128xf32> to vector<1x1x8x128xf32>
    tpu.vector_store %arg4[%c0_48, %c4_49, %c0_50, %c0_51], %81 {strides = array<i32>} : memref<1x5x8x128xf32, #tpu.memory_space<vmem>>, vector<1x1x8x128xf32>,
    return
  }
  func.func @transform_0(%arg0: i32, %arg1: i32) -> (i32, i32) {
    %c1_i32 = arith.constant 1 : i32
    %0 = arith.muli %arg0, %c1_i32 : i32
    %1 = arith.addi %0, %arg1 : i32
    %c0_i32 = arith.constant 0 : i32
    %2 = arith.minsi %1, %c0_i32 : i32
    %c0_i32_0 = arith.constant 0 : i32
    %c0_i32_1 = arith.constant 0 : i32
    return %2, %c0_i32_0 : i32, i32
  }
  func.func @transform_1(%arg0: i32, %arg1: i32) -> (i32, i32) {
    %c1_i32 = arith.constant 1 : i32
    %0 = arith.muli %arg0, %c1_i32 : i32
    %1 = arith.addi %0, %arg1 : i32
    %c0_i32 = arith.constant 0 : i32
    %2 = arith.minsi %1, %c0_i32 : i32
    %c0_i32_0 = arith.constant 0 : i32
    %c0_i32_1 = arith.constant 0 : i32
    return %2, %c0_i32_0 : i32, i32
  }
  func.func @transform_2(%arg0: i32, %arg1: i32) -> (i32, i32, i32, i32) {
    %c0_i32 = arith.constant 0 : i32
    %c0_i32_0 = arith.constant 0 : i32
    %c0_i32_1 = arith.constant 0 : i32
    %c0_i32_2 = arith.constant 0 : i32
    return %arg0, %c0_i32, %c0_i32_0, %c0_i32_1 : i32, i32, i32, i32
  }
}

</mosaic_0001>

<llo_original>
// kernel: tpu_custom_call.1
$region0: #{tpu_custom_call.1}
  #allocation0 [shape = 'u32[]', space=smem, size = 0x4, offset = 0x4, fixed_abs, tag = 'smem constant byte address 0x4 - core index']
  #allocation1 [shape = 'u32[144,128]{1,0:T(1,128)}', space=vmem, size = 0x12000, scoped, tag = 'internal scratch']
  %s0 = inlined_call_operand.hbm [shape: f32[8,128], index: 0, kind: input, shape index: {}]
  %s1 = inlined_call_operand.hbm [shape: f32[8,128], index: 1, kind: input, shape index: {}]
  %s2 = inlined_call_operand.hbm [shape: f32[1,5,8,128], index: 2, kind: output, shape index: {}]
  %s3 = sld [smem:[#allocation0]]
  $region30: #{tpu_custom_call.1} parent=0
    _
  %s5 = ssub.s32 1, %s3
  %s6 = scalar_select 0, %s5, %s3
  $region1: #{tpu_custom_call.1} parent=0
    #allocation2 [shape = 'u8[4096]{0}', space=vmem, size = 0x1000, scoped, tag = 'input window, operand 0, single buffered']
    #allocation3 [shape = 's32[1]{0}', space=sflag, size = 0x4, scoped, tag = 'scoped memory for tpu_custom_call.1']
    #allocation4 [shape = 's32[1]{0}', space=sflag, size = 0x4, scoped, tag = 'scoped memory for tpu_custom_call.1']
    #allocation5 [shape = 'u8[4096]{0}', space=vmem, size = 0x1000, scoped, tag = 'input window, operand 1, single buffered']
    #allocation6 [shape = 's32[1]{0}', space=sflag, size = 0x4, scoped, tag = 'scoped memory for tpu_custom_call.1']
    #allocation7 [shape = 'u8[20480]{0}', space=vmem, size = 0x5000, scoped, tag = 'output window, operand 0, single buffered']
    %7 = vsyncpa [#allocation3], 0
    %8 = vsyncpa [#allocation6], 0
    %9 = vsyncpa [#allocation4], 0
    // Predicated region
    $region2: #{tpu_custom_call.1} parent=1 // pred_check
      _
    $region3: #{tpu_custom_call.1} parent=1 // pred_check_branch
      %11 = sbr.rel (0) target = $region5
    $region4: #{tpu_custom_call.1} parent=1 // pred_region
      %s12 = sadd.s32 0, 0
      %p13 = scmp.lt.s32.totalorder %s12, 0
      %s14 = scalar_select %p13, %s12, 0
      %s16 = ssub.s32 128, 128
      %17 = vsyncadd [#allocation3], %s16
      %s18 = smul.addr %s14, 128
      %s19 = scalar_lea.hbm %s0, %s18
      %s21 = sshll.u32 [#allocation2], 4
      %s22 = int_to_ptr.vmem [resolvable:$true] %s21
      %24 = dma.hbm_to_vmem [thread:$0]  %s19, 128, %s22, [#allocation3]
    $region5: #{tpu_custom_call.1} parent=1 // pred_fallthru
      _
    // Predicated region
    $region6: #{tpu_custom_call.1} parent=1 // pred_check
      _
    $region7: #{tpu_custom_call.1} parent=1 // pred_check_branch
      %26 = sbr.rel (0) target = $region9
    $region8: #{tpu_custom_call.1} parent=1 // pred_region
      %s27 = sadd.s32 0, 0
      %p28 = scmp.lt.s32.totalorder %s27, 0
      %s29 = scalar_select %p28, %s27, 0
      %s31 = ssub.s32 128, 128
      %32 = vsyncadd [#allocation6], %s31
      %s33 = smul.addr %s29, 128
      %s34 = scalar_lea.hbm %s1, %s33
      %s36 = sshll.u32 [#allocation5], 4
      %s37 = int_to_ptr.vmem [resolvable:$true] %s36
      %39 = dma.hbm_to_vmem [thread:$0]  %s34, 128, %s37, [#allocation6]
    $region9: #{tpu_custom_call.1} parent=1 // pred_fallthru
      _
    // Predicated region
    $region10: #{tpu_custom_call.1} parent=1 // pred_check
      _
    $region11: #{tpu_custom_call.1} parent=1 // pred_check_branch
      %41 = sbr.rel (0) target = $region13
    $region12: #{tpu_custom_call.1} parent=1 // pred_region
      %42 = dma.done [#allocation3], 128
    $region13: #{tpu_custom_call.1} parent=1 // pred_fallthru
      _
    // Predicated region
    $region14: #{tpu_custom_call.1} parent=1 // pred_check
      _
    $region15: #{tpu_custom_call.1} parent=1 // pred_check_branch
      %44 = sbr.rel (0) target = $region17
    $region16: #{tpu_custom_call.1} parent=1 // pred_region
      %45 = dma.done [#allocation6], 128
    $region17: #{tpu_custom_call.1} parent=1 // pred_fallthru
      _
    %s46 = sadd.s32 0, 0
    %p47 = scmp.lt.s32.totalorder %s46, 0
    %s48 = scalar_select %p47, %s46, 0
    %s49 = sadd.s32 0, 0
    %p50 = scmp.lt.s32.totalorder %s49, 0
    %s51 = scalar_select %p50, %s49, 0
    %p52 = scmp.eq.s32.totalorder 0, 0
    // Predicated region
    $region18: #{tpu_custom_call.1} parent=1 // pred_check
      %p53 = pneg %p52
    $region19: #{tpu_custom_call.1} parent=1 // pred_check_branch
      %55 = sbr.rel (%p53) target = $region21
    $region20: #{tpu_custom_call.1} parent=1 // pred_region
      %56 = vst [vmem:[#allocation7] sm:$0xff] 0.0
      %57 = vst [vmem:[#allocation7 + $0x8] sm:$0xff] 0.0
      %58 = vst [vmem:[#allocation7 + $0x10] sm:$0xff] 0.0
      %59 = vst [vmem:[#allocation7 + $0x18] sm:$0xff] 0.0
      %60 = vst [vmem:[#allocation7 + $0x20] sm:$0xff] 0.0
    $region21: #{tpu_custom_call.1} parent=1 // pred_fallthru
      _
    %v61 = vld [vmem:[#allocation2] sm:$0xff]
    %v62 = vld [vmem:[#allocation5] sm:$0xff]
    %vm63 = vcmp.gt.f32.partialorder %v62, 0.0
    %v64 = vsel %vm63, 1, 0
    %v65 = vcvt.s32.f32 %v64
    %v66 = vand.u32 2147483647, %v61
    %v67 = vsub.f32 0.0, %v66
    %v68 = vmul.f32 %v67, 1.442695
    %v69 = vpow.pop %v68
    %v70 = vadd.f32 %v69, 1.0
    %v71 = vrcp.pop %v70
    %v72 = vmul.f32 %v70, %v71
    %v73 = vsub.f32 2.0, %v72
    %v74 = vmul.f32 %v71, %v73
    %vm75 = vcmp.ge.f32.partialorder %v61, 0.0
    %v76 = vmul.f32 %v69, %v74
    %v77 = vsel %vm75, %v74, %v76
    %v78 = vmax.f32 %v61, 0.0
    %v79 = vmul.f32 %v61, %v65
    %v80 = vsub.f32 %v78, %v79
    %v81 = vlog2.pop %v70
    %v82 = vmul.f32 %v81, 0.6931472
    %v83 = vadd.f32 %v80, %v82
    %v84 = vmul.f32 %v77, %v65
    %v85 = vsub.f32 1.0, %v77
    %v86 = vsub.f32 %v77, %v84
    %v87 = vsub.f32 %v65, %v84
    %v88 = vadd.f32 %v86, %v87
    %v89 = vmul.f32 %v88, %v88
    %v90 = vld [vmem:[#allocation7] sm:$0xff]
    %v91 = vadd.f32 %v84, 0.0
    %v92 = vadd.f32 %v90, %v91
    %93 = vst [vmem:[#allocation7] sm:$0xff] %v92
    %s94 = scalar_lea.vmem [#allocation7], 8
    %v95 = vld [vmem:[%s94] sm:$0xff]
    %v96 = vadd.f32 %v77, 0.0
    %v97 = vadd.f32 %v95, %v96
    %98 = vst [vmem:[%s94] sm:$0xff] %v97
    %s99 = scalar_lea.vmem [#allocation7], 16
    %v100 = vld [vmem:[%s99] sm:$0xff]
    %v101 = vadd.f32 %v65, 0.0
    %v102 = vadd.f32 %v100, %v101
    %103 = vst [vmem:[%s99] sm:$0xff] %v102
    %s104 = scalar_lea.vmem [#allocation7], 24
    %v105 = vld [vmem:[%s104] sm:$0xff]
    %v106 = vmul.f32 %v85, %v85
    %v107 = vmul.f32 %v62, %v106
    %v108 = vadd.f32 %v107, 0.0
    %v109 = vadd.f32 %v105, %v108
    %110 = vst [vmem:[%s104] sm:$0xff] %v109
    %s111 = scalar_lea.vmem [#allocation7], 32
    %v112 = vld [vmem:[%s111] sm:$0xff]
    %v113 = vmul.f32 %v89, %v83
    %v114 = vadd.f32 %v113, 0.0
    %v115 = vadd.f32 %v112, %v114
    %116 = vst [vmem:[%s111] sm:$0xff] %v115
    // Predicated region
    $region22: #{tpu_custom_call.1} parent=1 // pred_check
      _
    $region23: #{tpu_custom_call.1} parent=1 // pred_check_branch
      %118 = sbr.rel (0) target = $region25
    $region24: #{tpu_custom_call.1} parent=1 // pred_region
      %s120 = ssub.s32 640, 640
      %121 = vsyncadd [#allocation4], %s120
      %s122 = sshll.u32 [#allocation7], 4
      %s123 = int_to_ptr.vmem [resolvable:$true] %s122
      %128 = dma.vmem_to_hbm [thread:$0]  %s123, 640, %s2, [#allocation4], 128, 128, 8
    $region25: #{tpu_custom_call.1} parent=1 // pred_fallthru
      _
    // Predicated region
    $region26: #{tpu_custom_call.1} parent=1 // pred_check
      _
    $region27: #{tpu_custom_call.1} parent=1 // pred_check_branch
      %130 = sbr.rel (0) target = $region29
    $region28: #{tpu_custom_call.1} parent=1 // pred_region
      %131 = dma.done [#allocation4], 640
    $region29: #{tpu_custom_call.1} parent=1 // pred_fallthru
      _
    %132 = vsyncpa [#allocation3], 1
    %133 = vsyncpa [#allocation6], 1
    %134 = vsyncpa [#allocation4], 1

</llo_original>
